<compile_context>
chip_gen: v5e
topology: v5e:2x2
jax: 0.10.0
libtpu: 0.0.40
codegen_flags: <defaults>
</compile_context>

<pallas_src>
import jax
import jax.numpy as jnp
from jax.experimental import pallas as pl
from jax.experimental.pallas import tpu as pltpu  # noqa: F401  (kept for TPU backend symbols)

LTIMES = 8
TEMPERATURE = 0.01

# ----- configuration (chosen so k = int(max(D1, D2) * 2 / LTIMES) >= 1) -----
N = 4          # ensemble size
D1 = 8         # input features per member
D2 = 4         # output features per member
BW = 3         # maxBWPow
KF = int(max(D1, D2) * 2 / LTIMES)   # k = 2
B = 8          # batch


# --------------------------- quantization (JAX glue) ------------------------
def quant_weight(W, thres, k, n, max_bw=BW):
    """Replicates module.quant() with update_partition=True.

    W:     (n, C)   parameter tensor (C = D_i * k)
    thres: (max_bw-1, D_i) threshold means
    """
    res_denos = jnp.array([3.0, 5.0, 17.0, 257.0, 65537.0], dtype=jnp.float32)
    rbf_mu = jnp.array([0.0, 1.0, 2.0, 3.0], dtype=jnp.float32)
    rbf_sigma = 0.6
    eps = jnp.float32(1e-16)
    clamp_value = [2.0, 8.0]
    C = W.shape[1]

    beta = jnp.max(W)
    alpha = jnp.min(W)

    s = (beta - alpha) / res_denos[0]
    total = s * jnp.round(W / s)                       # vals.sum(0) so far

    for idx in range(1, max_bw):
        s = s / res_denos[idx]
        res_err = W - total                            # (n, C)

        order = jnp.argsort(res_err, axis=0)           # (n, C) original indices
        sorted_err = jnp.take_along_axis(res_err, order, axis=0)
        T = jax.nn.one_hot(order, n, dtype=jnp.float32)  # (n, C, n) -> 'cba'

        delta = sorted_err[1:] - sorted_err[:-1]       # (n-1, C)
        # guard against a degenerate all-equal column (torch would produce NaN
        # and trip the module's nan check); identical result otherwise.
        delta = delta / jnp.maximum(jnp.max(delta), eps)

        thres_col = jnp.repeat(thres[idx - 1], k)      # repeat_interleave -> (C,)
        # df_lt(delta, sigmoid(thres), 0.01)
        msp = jax.nn.sigmoid((delta - jax.nn.sigmoid(thres_col)[None, :]) / 0.01)

        round_split = jnp.concatenate(
            [jnp.zeros((1, C), jnp.float32), msp], axis=0)        # (n, C)
        csum = jnp.cumsum(round_split, axis=0)[:, :, None]        # (n, C, 1)

        # rbf_wmeans: exp(-|x - mu + eps| / (2 sigma^2)), then straight-through round
        cv = jnp.exp(-jnp.abs(csum - rbf_mu[None, None, :] + eps)
                     / (2.0 * rbf_sigma ** 2))
        cv = jnp.round(cv)                                         # (n, C, 4)

        group_means = (sorted_err[:, :, None] * cv).sum(axis=0) / (cv.sum(axis=0) + eps)
        inner_grouped = jnp.einsum('abc,bc->ab', cv, group_means)  # (n, C)
        grouped = jnp.einsum('cb,cba->ab', inner_grouped, T)       # unsort -> (n, C)

        bits = jnp.round(grouped / s)
        bits = jnp.clip(bits, -clamp_value[idx - 1], clamp_value[idx - 1])
        total = total + s * bits

    return total


# ------------------------------ Pallas kernel -------------------------------
def _blockdiag_matmul_kernel(x_ref, w_ref, o_ref):
    # x_ref: (B, N*D1)  activations with N folded into lanes
    # w_ref: (N*D1, N*D2)  block-diagonal weight (block n = K_n @ V_n^T)
    # o_ref: (B, N*D2)
    o_ref[...] = jnp.dot(
        x_ref[...], w_ref[...], preferred_element_type=jnp.float32
    ).astype(o_ref.dtype)


def ensemble_forward(x, quant_K, quant_V):
    """x: (B, N, D1), quant_K: (N, D1, k), quant_V: (N, D2, k) -> (B, N, D2)."""
    bb, nn, d1 = x.shape
    d2 = quant_V.shape[1]

    # Precompute per-member weights on the host/XLA side (tiny tensors),
    # then lay them out as a block-diagonal matrix so the kernel is one matmul.
    w = jnp.einsum('nik,nok->nio', quant_K, quant_V)          # (N, D1, D2)
    eye = jnp.eye(nn, dtype=w.dtype)
    w_bd = jnp.einsum('nio,nm->nimo', w, eye).reshape(nn * d1, nn * d2)

    x2d = x.reshape(bb, nn * d1)                              # contiguous view

    # Single invocation: whole arrays fit trivially in VMEM (< 4 KiB total),
    # so no grid / no per-step DMA pipelining is needed.
    out2d = pl.pallas_call(
        _blockdiag_matmul_kernel,
        out_shape=jax.ShapeDtypeStruct((bb, nn * d2), x.dtype),
    )(x2d, w_bd)

    return out2d.reshape(bb, nn, d2)                          # contiguous view


def module_forward(x, K, V, thres_K, thres_V):
    qK = quant_weight(K, thres_K, KF, N).reshape(N, D1, KF)
    qV = quant_weight(V, thres_V, KF, N).reshape(N, D2, KF)
    return ensemble_forward(x, qK, qV), qK, qV


# --------------------------------- main --------------------------------------
if __name__ == "__main__":
    key = jax.random.PRNGKey(0)
    k_k, k_v, k_x = jax.random.split(key, 3)

    # kaiming_normal_ on a 2D (N, C) tensor: std = sqrt(2 / fan_in), fan_in = C
    K = jax.random.normal(k_k, (N, D1 * KF), jnp.float32) * jnp.sqrt(2.0 / (D1 * KF))
    V = jax.random.normal(k_v, (N, D2 * KF), jnp.float32) * jnp.sqrt(2.0 / (D2 * KF))
    thres_K = jnp.full((BW - 1, D1), -1.3, jnp.float32)
    thres_V = jnp.full((BW - 1, D2), -1.3, jnp.float32)

    x = jax.random.normal(k_x, (B, N, D1), jnp.float32)

    act, qK, qV = module_forward(x, K, V, thres_K, thres_V)
    act = jax.block_until_ready(act)

    # pure-JAX reference for the einsum hot path
    w_ref = jnp.einsum('nik,nok->nio', qK, qV)
    act_ref = jnp.einsum('bnd,ndl->bnl', x, w_ref)
    assert act.shape == (B, N, D2)
    assert jnp.allclose(act, act_ref, atol=1e-3, rtol=1e-3)
    assert not bool(jnp.any(jnp.isnan(act)))   # mirrors the module's nan check

    print("KERNEL_OK")
</pallas_src>

<mosaic_0001>
module attributes {stable_mosaic.version = 11 : i64} {
  func.func @_blockdiag_matmul_kernel(%arg0: memref<8x32xf32, #tpu.memory_space<vmem>>, %arg1: memref<32x16xf32, #tpu.memory_space<vmem>>, %arg2: memref<8x16xf32, #tpu.memory_space<vmem>>) attributes {dimension_semantics = [], scalar_prefetch = 0 : i64, scratch_operands = 0 : i64, tpu.core_type = #tpu.core_type<tc>} {
    %c0 = arith.constant 0 : index
    %c0_0 = arith.constant 0 : index
    %0 = vector.load %arg0[%c0, %c0_0] : memref<8x32xf32, #tpu.memory_space<vmem>>, vector<8x32xf32>
    %c0_1 = arith.constant 0 : index
    %c0_2 = arith.constant 0 : index
    %1 = vector.load %arg1[%c0_1, %c0_2] : memref<32x16xf32, #tpu.memory_space<vmem>>, vector<32x16xf32>
    %cst = arith.constant dense<0.000000e+00> : vector<8x16xf32>
    %2 = tpu.matmul %0, %1, %cst {dimension_numbers = #tpu.dot_dimension_numbers<[1], [0], [0], [1], [0, 0, 1, 1], [], []>} : vector<8x32xf32>, vector<32x16xf32>, vector<8x16xf32> -> vector<8x16xf32>
    %c0_3 = arith.constant 0 : index
    %c0_4 = arith.constant 0 : index
    %3 = vector.load %arg2[%c0_3, %c0_4] : memref<8x16xf32, #tpu.memory_space<vmem>>, vector<8x16xf32>
    tpu.vector_store %arg2[%c0_3, %c0_4], %2 {strides = array<i32>} : memref<8x16xf32, #tpu.memory_space<vmem>>, vector<8x16xf32>,
    return
  }
}

</mosaic_0001>

<llo_original>
// kernel: tpu_custom_call.1
$region0: #{tpu_custom_call.1}
  #allocation0 [shape = 'u32[]', space=smem, size = 0x4, offset = 0x4, fixed_abs, tag = 'smem constant byte address 0x4 - core index']
  #allocation1 [shape = 'u32[72,128]{1,0:T(1,128)}', space=vmem, size = 0x9000, scoped, tag = 'internal scratch']
  %s0 = inlined_call_operand.vmem [shape: f32[8,32], index: 0, kind: input, shape index: {}]
  %s1 = inlined_call_operand.vmem [shape: f32[32,16], index: 1, kind: input, shape index: {}]
  %s2 = inlined_call_operand.hbm [shape: f32[8,16], index: 2, kind: output, shape index: {}]
  %s3 = sld [smem:[#allocation0]]
  $region18: #{tpu_custom_call.1} parent=0
    _
  %s5 = ssub.s32 1, %s3
  %s6 = scalar_select 0, %s5, %s3
  $region1: #{tpu_custom_call.1} parent=0
    #allocation2 [shape = 'u8[4096]{0}', space=vmem, size = 0x1000, scoped, tag = 'output window, operand 0, single buffered']
    #allocation3 [shape = 's32[1]{0}', space=sflag, size = 0x4, scoped, tag = 'scoped memory for tpu_custom_call.1']
    %7 = vsyncpa [#allocation3], 0
    // Predicated region
    $region2: #{tpu_custom_call.1} parent=1 // pred_check
      _
    $region3: #{tpu_custom_call.1} parent=1 // pred_check_branch
      %9 = sbr.rel (0) target = $region5
    $region4: #{tpu_custom_call.1} parent=1 // pred_region
      _
    $region5: #{tpu_custom_call.1} parent=1 // pred_fallthru
      _
    // Predicated region
    $region6: #{tpu_custom_call.1} parent=1 // pred_check
      _
    $region7: #{tpu_custom_call.1} parent=1 // pred_check_branch
      %11 = sbr.rel (0) target = $region9
    $region8: #{tpu_custom_call.1} parent=1 // pred_region
      _
    $region9: #{tpu_custom_call.1} parent=1 // pred_fallthru
      _
    %v12 = vld [vmem:[%s0] sm:$0xff]
    %v13 = vld [vmem:[%s1] sm:$0xff]
    %v14 = vld [vmem:[%s1 + $0x8] sm:$0xff]
    %v15 = vld [vmem:[%s1 + $0x10] sm:$0xff]
    %v16 = vld [vmem:[%s1 + $0x18] sm:$0xff]
    %vm17 = vcmask 261120
    %v19 = vsel %vm17, %v12, 0
    %21 = vmatpush.msra.mxu0 0.0
    %22 = vmatpush.msra.mxu0 0.0
    %23 = vmatpush.msra.mxu0 0.0
    %24 = vmatpush.msra.mxu0 0.0
    %25 = vmatpush.msra.mxu0 0.0
    %26 = vmatpush.msra.mxu0 0.0
    %27 = vmatpush.msra.mxu0 0.0
    %28 = vmatpush.msra.mxu0 0.0
    %29 = vmatpush.msra.mxu0 0.0
    %30 = vmatpush.msra.mxu0 0.0
    %31 = vmatpush.msra.mxu0 0.0
    %32 = vmatpush.msra.mxu0 0.0
    %33 = vmatpush.msra.mxu0 %v16
    %34 = vmatpush.msra.mxu0 %v15
    %35 = vmatpush.msra.mxu0 %v14
    %36 = vmatpush.msra.mxu0 %v13
    %37 = vmatmul.f32.gmra.mxu0 %v19
    %v38 = vpop.f32.mrf.mxu0
    %v39 = vadd.f32 0.0, %v38
    %40 = vdwg.mxu0
    %vm41 = vcmask 130048
    %42 = vst.msk [vmem:[#allocation2] sm:$0xff] %vm41, %v39
    // Predicated region
    $region10: #{tpu_custom_call.1} parent=1 // pred_check
      _
    $region11: #{tpu_custom_call.1} parent=1 // pred_check_branch
      %44 = sbr.rel (0) target = $region13
    $region12: #{tpu_custom_call.1} parent=1 // pred_region
      %46 = vsyncadd [#allocation3], 0
      %s48 = sshll.u32 [#allocation2], 4
      %s49 = int_to_ptr.vmem [resolvable:$true] %s48
      %s50 = sshll.u32 %s2, 4
      %s51 = int_to_ptr.hbm [resolvable:$true] %s50
      %53 = dma.vmem_to_hbm [thread:$0]  %s49, 128, %s51, [#allocation3]
    $region13: #{tpu_custom_call.1} parent=1 // pred_fallthru
      _
    // Predicated region
    $region14: #{tpu_custom_call.1} parent=1 // pred_check
      _
    $region15: #{tpu_custom_call.1} parent=1 // pred_check_branch
      %55 = sbr.rel (0) target = $region17
    $region16: #{tpu_custom_call.1} parent=1 // pred_region
      %57 = dma.done [#allocation3], 128
    $region17: #{tpu_custom_call.1} parent=1 // pred_fallthru
      _
    %58 = vsyncpa [#allocation3], 1

</llo_original>
